<compile_context>
chip_gen: v7x
topology: tpu7x:2x2x1
jax: 0.10.0
libtpu: 0.0.40
codegen_flags: <defaults>
</compile_context>

<pallas_src>
import functools

import jax
import jax.numpy as jnp
from jax.experimental import pallas as pl
from jax.experimental.pallas import tpu as pltpu


# ---------------------------------------------------------------------------
# Interpolation-weight construction (plain JAX glue, runs once per shape).
# ---------------------------------------------------------------------------
def _make_interp_matrix(out_size: int, in_size: int) -> jnp.ndarray:
    """(out_size, in_size) row-stochastic matrix reproducing PyTorch's bilinear
    interpolation along one axis with align_corners=False (antialias=False)."""
    scale = in_size / out_size
    real = (jnp.arange(out_size, dtype=jnp.float32) + 0.5) * scale - 0.5
    real = jnp.maximum(real, 0.0)                       # PyTorch clamps negatives to 0
    idx0 = jnp.minimum(jnp.floor(real).astype(jnp.int32), in_size - 1)
    idx1 = jnp.minimum(idx0 + 1, in_size - 1)           # clamp upper neighbor
    w1 = real - idx0.astype(jnp.float32)
    w0 = 1.0 - w1
    oh0 = jax.nn.one_hot(idx0, in_size, dtype=jnp.float32)
    oh1 = jax.nn.one_hot(idx1, in_size, dtype=jnp.float32)
    return w0[:, None] * oh0 + w1[:, None] * oh1        # rows sum to 1


# ---------------------------------------------------------------------------
# Kernels
# ---------------------------------------------------------------------------
def _kron_kernel(x_ref, k_ref, o_ref):
    # x_ref: (B, H_in*W_in)   k_ref: (H_in*W_in, H_out*W_out)   o_ref: (B, H_out*W_out)
    # One flat MXU matmul; f32 accumulation; single rounding step at the store.
    o_ref[...] = jnp.dot(
        x_ref[...], k_ref[...], preferred_element_type=jnp.float32
    ).astype(o_ref.dtype)


def _sep_kernel(x_ref, wht_ref, wwt_ref, o_ref, *, h_first: bool):
    # x_ref:   (B, H_in, W_in)
    # wht_ref: (H_in, H_out)     (W_h transposed)
    # wwt_ref: (W_in, W_out)     (W_w transposed)
    # o_ref:   (B, H_out, W_out)
    xb = x_ref[...]
    wht = wht_ref[...]
    wwt = wwt_ref[...]
    B, H_in, W_in = xb.shape
    H_out = wht.shape[1]
    W_out = wwt.shape[1]
    cdt = xb.dtype

    # Both passes are flat 2-D MXU matmuls (M = B * spatial); the height contraction
    # goes through an in-tile XLU transpose instead of B tiny batched matmuls.
    # NOTE: the leading-dim merges below are layout-free only when the merged sublane
    # dim is a multiple of 8 (f32) / 16 (bf16); other shapes incur a VMEM relayout.
    if h_first:
        xt = jnp.swapaxes(xb, 1, 2)                                # (B, W_in, H_in)  XLU
        t = jnp.dot(xt.reshape(B * W_in, H_in), wht,
                    preferred_element_type=jnp.float32)            # (B*W_in, H_out)
        t = t.astype(cdt).reshape(B, W_in, H_out)
        t = jnp.swapaxes(t, 1, 2)                                  # (B, H_out, W_in)  XLU
        out = jnp.dot(t.reshape(B * H_out, W_in), wwt,
                      preferred_element_type=jnp.float32)          # (B*H_out, W_out)
        out = out.reshape(B, H_out, W_out)
    else:
        t = jnp.dot(xb.reshape(B * H_in, W_in), wwt,
                    preferred_element_type=jnp.float32)            # (B*H_in, W_out)
        t = t.astype(cdt).reshape(B, H_in, W_out)
        t = jnp.swapaxes(t, 1, 2)                                  # (B, W_out, H_in)  XLU
        out = jnp.dot(t.reshape(B * W_out, H_in), wht,
                      preferred_element_type=jnp.float32)          # (B*W_out, H_out)
        out = jnp.swapaxes(out.reshape(B, W_out, H_out), 1, 2)     # (B, H_out, W_out)

    o_ref[...] = out.astype(o_ref.dtype)


# ---------------------------------------------------------------------------
# Sizing helpers (all Python ints at trace time)
# ---------------------------------------------------------------------------
def _pad2(rows: int, cols: int, itemsize: int, sub: int) -> int:
    """Bytes of a (rows, cols) VMEM tile after (sublane, 128-lane) padding."""
    return (-(-rows // sub) * sub) * (-(-cols // 128) * 128) * itemsize


def _vmem_limit_bytes() -> int:
    """Per-generation scoped-VMEM request: ~3/4 of physical, capped at 96 MiB.
    v5e/v6e (128 MiB) -> 96 MiB; v7x (64 MiB/TC) -> 48 MiB; fallback -> 48 MiB."""
    try:
        cap = int(pltpu.get_tpu_info().vmem_capacity_bytes)
    except Exception:
        cap = 64 << 20
    return min(96 << 20, max(32 << 20, (cap * 3) // 4))


def _choose_grid(nc: int, b: int):
    """Pick (num_steps, B, NC_pad).  Keep >=2 (and even) grid steps when possible so
    dimension_semantics=('parallel',) can split the grid across v7x's two TCs."""
    num_steps = -(-nc // b)
    if nc > 1 and num_steps == 1:
        num_steps = 2
    elif num_steps > 2 and num_steps % 2 == 1:
        num_steps += 1
    b = -(-nc // num_steps)
    return num_steps, b, num_steps * b


# ---------------------------------------------------------------------------
# Public entry point: equivalent of Interpolate(size, mode).forward(x), NCHW.
# ---------------------------------------------------------------------------
@functools.partial(jax.jit, static_argnames=("size", "mode"))
def interpolate(x: jnp.ndarray, size, mode: str = "bilinear") -> jnp.ndarray:
    if mode != "bilinear":
        # TODO(synk): only 'bilinear' (align_corners=False, antialias=False) on 4D NCHW
        # is implemented; 'nearest' / 'bicubic' / trilinear are not supported here.
        raise NotImplementedError(f"mode={mode!r} not supported")

    N, C, H_in, W_in = x.shape
    H_out, W_out = size
    NC = N * C
    HW_in = H_in * W_in
    HW_out = H_out * W_out

    # bf16 inputs keep bf16 MXU operands (f32 accumulation); everything else runs f32.
    compute_dtype = jnp.bfloat16 if x.dtype == jnp.bfloat16 else jnp.float32
    sub = 16 if compute_dtype == jnp.bfloat16 else 8
    in_isz = jnp.dtype(compute_dtype).itemsize
    out_isz = jnp.dtype(x.dtype).itemsize

    vmem_limit = _vmem_limit_bytes()

    wh = _make_interp_matrix(H_out, H_in)     # (H_out, H_in) f32
    ww = _make_interp_matrix(W_out, W_in)     # (W_out, W_in) f32

    # Path choice: lane-sparse widths go to the fused-kron path when the kron weight
    # fits comfortably in VMEM; everything else uses the separable two-pass path.
    kron_bytes = _pad2(HW_in, HW_out, in_isz, sub)
    use_kron = (min(W_in, W_out) < 128) and (kron_bytes <= (12 << 20))

    if use_kron:
        # K[(hi,wi),(ho,wo)] = W_h[ho,hi] * W_w[wo,wi]
        k_mat = jnp.einsum("oh,pw->hwop", wh, ww).reshape(HW_in, HW_out)
        k_mat = k_mat.astype(compute_dtype)
        x_flat = x.reshape(NC, HW_in).astype(compute_dtype)   # free reshape in HBM

        # --- block sizing on (sublane,128)-padded footprints ---
        in_cols = -(-HW_in // 128) * 128
        out_cols = -(-HW_out // 128) * 128
        per_img = 2 * (in_cols * in_isz + out_cols * out_isz) + 2 * out_cols * 4
        budget = vmem_limit - 2 * kron_bytes - (2 << 20)
        b_budget = max(1, budget // per_img)
        b_target = max(1, (4 << 20) // max(1, in_cols * in_isz))   # ~4 MiB input tiles
        B = max(1, min(b_budget, b_target, NC))

        num_steps, B, NC_pad = _choose_grid(NC, B)
        if num_steps > 1:
            B = -(-B // sub) * sub          # sublane-aligned block (Mosaic (8,128) rule)
            NC_pad = num_steps * B

        if NC_pad != NC:
            x_flat = jnp.pad(x_flat, ((0, NC_pad - NC), (0, 0)))

        cost = pl.CostEstimate(
            flops=2 * NC_pad * HW_in * HW_out,
            transcendentals=0,
            bytes_accessed=NC_pad * (HW_in * in_isz + HW_out * out_isz)
            + HW_in * HW_out * in_isz,
        )

        out_flat = pl.pallas_call(
            _kron_kernel,
            out_shape=jax.ShapeDtypeStruct((NC_pad, HW_out), x.dtype),
            grid_spec=pltpu.PrefetchScalarGridSpec(
                num_scalar_prefetch=0,
                grid=(num_steps,),
                in_specs=[
                    pl.BlockSpec((B, HW_in), lambda i: (i, 0)),
                    pl.BlockSpec((HW_in, HW_out), lambda i: (0, 0)),  # resident weights
                ],
                out_specs=pl.BlockSpec((B, HW_out), lambda i: (i, 0)),
            ),
            compiler_params=pltpu.CompilerParams(
                dimension_semantics=("parallel",),
                vmem_limit_bytes=vmem_limit,
            ),
            cost_estimate=cost,
        )(x_flat, k_mat)

        return out_flat[:NC].reshape(N, C, H_out, W_out)

    # ------------------------- separable path (large images) -------------------------
    wht = wh.T.astype(compute_dtype)          # (H_in, H_out)
    wwt = ww.T.astype(compute_dtype)          # (W_in, W_out)
    x_cmp = x.reshape(NC, H_in, W_in).astype(compute_dtype)

    # Apply the cheaper contraction order first (shrinking axis first).
    flops_h_first = H_out * H_in * W_in + H_out * W_in * W_out
    flops_w_first = H_in * W_in * W_out + H_in * W_out * H_out
    h_first = flops_h_first <= flops_w_first

    # --- block sizing on (sublane,128)-padded footprints ---
    in_img = _pad2(H_in, W_in, in_isz, sub)
    out_img = _pad2(H_out, W_out, out_isz, sub)
    inter_img = (
        _pad2(W_in, H_in, in_isz, sub) + _pad2(W_in, H_out, 4, 8)
        + _pad2(W_in, H_out, in_isz, sub) + _pad2(H_out, W_in, in_isz, sub)
        + _pad2(H_out, W_out, 4, 8) + _pad2(H_in, W_out, 4, 8)
        + _pad2(W_out, H_in, in_isz, sub) + _pad2(W_out, H_out, 4, 8)
    )
    per_img = 2 * (in_img + out_img) + inter_img           # in/out double-buffered
    w_bytes = 2 * (_pad2(H_in, H_out, in_isz, sub) + _pad2(W_in, W_out, in_isz, sub))
    budget = vmem_limit - w_bytes - (2 << 20)
    b_budget = max(1, budget // per_img)
    b_target = max(1, (4 << 20) // in_img)                  # ~4 MiB input tiles
    B = max(1, min(b_budget, b_target, NC))
    # TODO(synk): images so large that B=1 still exceeds the budget would need an extra
    # W-tiling grid axis; not implemented (not needed at these block sizes).

    num_steps, B, NC_pad = _choose_grid(NC, B)
    if NC_pad != NC:
        x_cmp = jnp.pad(x_cmp, ((0, NC_pad - NC), (0, 0), (0, 0)))

    cost = pl.CostEstimate(
        flops=2 * NC_pad * (flops_h_first if h_first else flops_w_first),
        transcendentals=0,
        bytes_accessed=NC_pad * (HW_in * in_isz + HW_out * out_isz),
    )

    out3 = pl.pallas_call(
        functools.partial(_sep_kernel, h_first=h_first),
        out_shape=jax.ShapeDtypeStruct((NC_pad, H_out, W_out), x.dtype),
        grid_spec=pltpu.PrefetchScalarGridSpec(
            num_scalar_prefetch=0,
            grid=(num_steps,),
            in_specs=[
                pl.BlockSpec((B, H_in, W_in), lambda i: (i, 0, 0)),
                pl.BlockSpec((H_in, H_out), lambda i: (0, 0)),   # resident weights
                pl.BlockSpec((W_in, W_out), lambda i: (0, 0)),   # resident weights
            ],
            out_specs=pl.BlockSpec((B, H_out, W_out), lambda i: (i, 0, 0)),
        ),
        compiler_params=pltpu.CompilerParams(
            dimension_semantics=("parallel",),
            vmem_limit_bytes=vmem_limit,
        ),
        cost_estimate=cost,
    )(x_cmp, wht, wwt)

    return out3[:NC].reshape(N, C, H_out, W_out)


# ---------------------------------------------------------------------------
# Self-test
# ---------------------------------------------------------------------------
if __name__ == "__main__":
    # Test 1: small NCHW input, 16x16 -> 8x8 (exercises the fused-kron path).
    key = jax.random.PRNGKey(0)
    x = jax.random.normal(key, (2, 4, 16, 16), dtype=jnp.float32)
    size = (8, 8)

    out = interpolate(x, size=size, mode="bilinear")
    out = jax.block_until_ready(out)

    wh = _make_interp_matrix(size[0], x.shape[2])
    ww = _make_interp_matrix(size[1], x.shape[3])
    ref = jnp.einsum("oh,nchw,pw->ncop", wh, x, ww)
    assert out.shape == (2, 4, 8, 8)
    assert jnp.allclose(out, ref, atol=1e-5, rtol=1e-5)

    # Test 2: wide input, 16x128 -> 8x256 (exercises the separable flat-matmul path).
    x2 = jax.random.normal(jax.random.PRNGKey(0), (1, 2, 16, 128), dtype=jnp.float32)
    out2 = jax.block_until_ready(interpolate(x2, size=(8, 256), mode="bilinear"))
    wh2 = _make_interp_matrix(8, 16)
    ww2 = _make_interp_matrix(256, 128)
    ref2 = jnp.einsum("oh,nchw,pw->ncop", wh2, x2, ww2)
    assert out2.shape == (1, 2, 8, 256)
    assert jnp.allclose(out2, ref2, atol=1e-4, rtol=1e-4)

    print("KERNEL_OK")
</pallas_src>

<mosaic_0001>
module attributes {stable_mosaic.version = 11 : i64} {
  func.func @_kron_kernel(%arg0: i32, %arg1: memref<8x256xf32, #tpu.memory_space<vmem>>, %arg2: memref<256x64xf32, #tpu.memory_space<vmem>>, %arg3: memref<8x64xf32, #tpu.memory_space<vmem>>) attributes {dimension_semantics = [#tpu.dimension_semantics<parallel>], iteration_bounds = array<i64: 2>, scalar_prefetch = 0 : i64, scratch_operands = 0 : i64, tpu.core_type = #tpu.core_type<tc>, window_params = [{transform_indices = @transform_0, window_bounds = array<i64: 8, 256>}, {pipeline_mode = #tpu.pipeline_mode<synchronous>, transform_indices = @transform_1, window_bounds = array<i64: 256, 64>}, {transform_indices = @transform_2, window_bounds = array<i64: 8, 64>}]} {
    %c0 = arith.constant 0 : index
    %c0_0 = arith.constant 0 : index
    %0 = vector.load %arg1[%c0, %c0_0] : memref<8x256xf32, #tpu.memory_space<vmem>>, vector<8x256xf32>
    %c0_1 = arith.constant 0 : index
    %c0_2 = arith.constant 0 : index
    %1 = vector.load %arg2[%c0_1, %c0_2] : memref<256x64xf32, #tpu.memory_space<vmem>>, vector<256x64xf32>
    %cst = arith.constant dense<0.000000e+00> : vector<8x64xf32>
    %2 = tpu.matmul %0, %1, %cst {dimension_numbers = #tpu.dot_dimension_numbers<[1], [0], [0], [1], [0, 0, 1, 1], [], []>} : vector<8x256xf32>, vector<256x64xf32>, vector<8x64xf32> -> vector<8x64xf32>
    %c0_3 = arith.constant 0 : index
    %c0_4 = arith.constant 0 : index
    %3 = vector.load %arg3[%c0_3, %c0_4] : memref<8x64xf32, #tpu.memory_space<vmem>>, vector<8x64xf32>
    tpu.vector_store %arg3[%c0_3, %c0_4], %2 {strides = array<i32>} : memref<8x64xf32, #tpu.memory_space<vmem>>, vector<8x64xf32>,
    return
  }
  func.func @transform_0(%arg0: i32) -> (i32, i32) {
    %c0_i32 = arith.constant 0 : i32
    %c0_i32_0 = arith.constant 0 : i32
    return %arg0, %c0_i32 : i32, i32
  }
  func.func @transform_1(%arg0: i32) -> (i32, i32) {
    %c0_i32 = arith.constant 0 : i32
    %c0_i32_0 = arith.constant 0 : i32
    %c0_i32_1 = arith.constant 0 : i32
    return %c0_i32, %c0_i32_0 : i32, i32
  }
  func.func @transform_2(%arg0: i32) -> (i32, i32) {
    %c0_i32 = arith.constant 0 : i32
    %c0_i32_0 = arith.constant 0 : i32
    return %arg0, %c0_i32 : i32, i32
  }
}

</mosaic_0001>

<llo_original>
// kernel: interpolate.1
$region0: #{interpolate.1}
  #allocation0 [shape = 'u32[]', space=smem, size = 0x4, offset = 0x4, fixed_abs, tag = 'smem constant byte address 0x4 - core index']
  #allocation1 [shape = 'u32[144,128]{1,0:T(1,128)}', space=vmem, size = 0x12000, scoped, tag = 'internal scratch']
  %s0 = inlined_call_operand.vmem [shape: f32[16,256], index: 0, kind: input, shape index: {}]
  %s1 = inlined_call_operand.vmem [shape: f32[256,64], index: 1, kind: input, shape index: {}]
  %s2 = inlined_call_operand.vmem [shape: f32[16,64], index: 2, kind: output, shape index: {}]
  %s3 = sld [smem:[#allocation0]]
  $region41: #{interpolate.1} parent=0
    _
  %s5 = ssub.s32 1, %s3
  %s6 = scalar_select 0, %s5, %s3
  loop: start=0, step=1, limit=4
  $region2: #{interpolate.1} parent=0 // loop_pre_header
    _
  $region3: #{interpolate.1} parent=0 // loop_header
    %s8 = sphi 0, %s12
    %p9 = scmp.ge.s32.totalorder %s8, 4
    %s18 = sphi 0, %s20
    %s21 = sphi 0, %s18
    %s22 = sphi 0, %s21
    %s38 = sphi 0, %s22
    %s42 = sphi 0, %s42
    %s44 = sphi 0, %s42
    %s45 = sphi 0, %s44
    %s59 = sphi 0, %s45
    %s65 = sphi 0, %s67
    %s68 = sphi 0, %s65
    %s69 = sphi 0, %s68
    %s85 = sphi 0, %s69
  $region4: #{interpolate.1} parent=0 // loop_header_branch
    %11 = sbr.rel (%p9) target = $region8
  $region5: #{interpolate.1} parent=0 // loop_body
    %s13 = ssub.s32 %s8, 1
    %s14 = ssub.s32 %s8, 2
    %s15 = sadd.s32 %s8, 1
    %s16 = ssub.s32 %s8, %s15
    %p17 = scmp.eq.s32.totalorder %s16, 0
    %s19 = sadd.s32 %s18, 1
    %s20 = scalar_select %p17, %s18, %s19
    %p23 = pneg %p17
    %p24 = scmp.eq.s32.totalorder %s8, 1
    %p25 = por %p23, %p24
    %p26 = scmp.ne.s32.totalorder %s18, %s21
    %p27 = scmp.eq.s32.totalorder %s8, 0
    %p28 = por %p26, %p27
    %p29 = scmp.ne.s32.totalorder %s18, %s21
    %p30 = scmp.eq.s32.totalorder %s13, 1
    %p31 = por %p29, %p30
    %p32 = scmp.ne.s32.totalorder %s21, %s22
    %p33 = scmp.eq.s32.totalorder %s13, 0
    %p34 = por %p32, %p33
    %p35 = scmp.ne.s32.totalorder %s21, %s22
    %p36 = scmp.eq.s32.totalorder %s14, 1
    %p37 = por %p35, %p36
    %p39 = scmp.ne.s32.totalorder %s22, %s38
    %p40 = scmp.eq.s32.totalorder %s14, 0
    %p41 = por %p39, %p40
    %s43 = sadd.s32 %s42, 1
    %p46 = scmp.eq.s32.totalorder %s8, 1
    %p47 = scmp.ne.s32.totalorder %s42, %s44
    %p48 = scmp.eq.s32.totalorder %s8, 0
    %p49 = por %p47, %p48
    %p50 = scmp.ne.s32.totalorder %s42, %s44
    %p51 = scmp.eq.s32.totalorder %s13, 1
    %p52 = por %p50, %p51
    %p53 = scmp.ne.s32.totalorder %s44, %s45
    %p54 = scmp.eq.s32.totalorder %s13, 0
    %p55 = por %p53, %p54
    %p56 = scmp.ne.s32.totalorder %s44, %s45
    %p57 = scmp.eq.s32.totalorder %s14, 1
    %p58 = por %p56, %p57
    %p60 = scmp.ne.s32.totalorder %s45, %s59
    %p61 = scmp.eq.s32.totalorder %s14, 0
    %p62 = por %p60, %p61
    %s63 = ssub.s32 %s8, %s15
    %p64 = scmp.eq.s32.totalorder %s63, 0
    %s66 = sadd.s32 %s65, 1
    %s67 = scalar_select %p64, %s65, %s66
    %p70 = pneg %p64
    %p71 = scmp.eq.s32.totalorder %s8, 1
    %p72 = por %p70, %p71
    %p73 = scmp.ne.s32.totalorder %s65, %s68
    %p74 = scmp.eq.s32.totalorder %s8, 0
    %p75 = por %p73, %p74
    %p76 = scmp.ne.s32.totalorder %s65, %s68
    %p77 = scmp.eq.s32.totalorder %s13, 1
    %p78 = por %p76, %p77
    %p79 = scmp.ne.s32.totalorder %s68, %s69
    %p80 = scmp.eq.s32.totalorder %s13, 0
    %p81 = por %p79, %p80
    %p82 = scmp.ne.s32.totalorder %s68, %s69
    %p83 = scmp.eq.s32.totalorder %s14, 1
    %p84 = por %p82, %p83
    %p86 = scmp.ne.s32.totalorder %s69, %s85
    %p87 = scmp.eq.s32.totalorder %s14, 0
    %p88 = por %p86, %p87
    %p89 = scmp.le.s32.totalorder 1, %s8
    %p90 = scmp.lt.s32.totalorder %s8, 3
    %p91 = pnand %p89, %p90
    %p92 = pneg %p91
    // Predicated region
    $region9: #{interpolate.1} parent=5 // pred_check
      _
    $region10: #{interpolate.1} parent=5 // pred_check_branch
      %94 = sbr.rel (%p91) target = $region12
    $region11: #{interpolate.1} parent=5 // pred_region
      %s95 = ssub.s32 %s8, 1
      // Predicated region
      $region13: #{interpolate.1} parent=11 // pred_check
        %p96 = pneg %p55
      $region14: #{interpolate.1} parent=11 // pred_check_branch
        %98 = sbr.rel (%p96) target = $region16
      $region15: #{interpolate.1} parent=11 // pred_region
        _
      $region16: #{interpolate.1} parent=11 // pred_fallthru
        _
    $region12: #{interpolate.1} parent=5 // pred_fallthru
      _
    %p99 = scmp.lt.s32.totalorder %s8, 2
    // Predicated region
    $region17: #{interpolate.1} parent=5 // pred_check
      %p100 = pneg %p99
    $region18: #{interpolate.1} parent=5 // pred_check_branch
      %102 = sbr.rel (%p100) target = $region20
    $region19: #{interpolate.1} parent=5 // pred_region
      // Predicated region
      $region21: #{interpolate.1} parent=19 // pred_check
        %p103 = pneg %p28
      $region22: #{interpolate.1} parent=19 // pred_check_branch
        %105 = sbr.rel (%p103) target = $region24
      $region23: #{interpolate.1} parent=19 // pred_region
        %p106 = scmp.lt.s32.totalorder %s8, 1
        %s107 = scalar_select %p106, %s8, 1
        %s108 = smul.addr %s107, 2
        %s109 = smul.addr %s108, 8
        %s110 = scalar_lea.vmem %s0, %s109
      $region24: #{interpolate.1} parent=19 // pred_fallthru
        _
    $region20: #{interpolate.1} parent=5 // pred_fallthru
      _
    %p111 = scmp.le.s32.totalorder 1, %s8
    %p112 = scmp.lt.s32.totalorder %s8, 3
    %p113 = pnand %p111, %p112
    %p114 = pneg %p113
    // Predicated region
    $region25: #{interpolate.1} parent=5 // pred_check
      _
    $region26: #{interpolate.1} parent=5 // pred_check_branch
      %116 = sbr.rel (%p113) target = $region28
    $region27: #{interpolate.1} parent=5 // pred_region
      %s117 = ssub.s32 %s8, 1
      %p118 = scmp.lt.s32.totalorder %s13, 1
      %s119 = scalar_select %p118, %s13, 1
      %s120 = smul.addr %s119, 2
      %s121 = smul.addr %s120, 8
      %s122 = scalar_lea.vmem %s0, %s121
      %p123 = pneg %p34
      %p124 = pneg %p31
      %p125 = pneg %p55
      %p126 = pneg %p52
      %p127 = pneg %p81
      %p128 = pneg %p78
      %p129 = scmp.lt.s32.totalorder %s13, 1
      %s130 = scalar_select %p129, %s13, 1
      %s131 = smul.addr %s130, 8
      %s132 = scalar_lea.vmem %s2, %s131
      %p133 = scmp.lt.s32.totalorder %s13, 1
      %s134 = scalar_select %p133, %s13, 1
      %s135 = smul.addr %s134, 2
      %s136 = smul.addr %s135, 8
      %s137 = scalar_lea.vmem %s0, %s136
      %p138 = scmp.lt.s32.totalorder %s13, 1
      %s139 = scalar_select %p138, %s13, 1
      %s140 = smul.addr %s139, 8
      %s141 = scalar_lea.vmem %s2, %s140
      %v142 = vld [vmem:[%s137] sm:$0xff]
      %v143 = vld [vmem:[%s137 + $0x8] sm:$0xff]
      %v144 = vld [vmem:[%s1] sm:$0xff]
      %v145 = vld [vmem:[%s1 + $0x8] sm:$0xff]
      %v146 = vld [vmem:[%s1 + $0x10] sm:$0xff]
      %v147 = vld [vmem:[%s1 + $0x18] sm:$0xff]
      %v148 = vld [vmem:[%s1 + $0x20] sm:$0xff]
      %v149 = vld [vmem:[%s1 + $0x28] sm:$0xff]
      %v150 = vld [vmem:[%s1 + $0x30] sm:$0xff]
      %v151 = vld [vmem:[%s1 + $0x38] sm:$0xff]
      %v152 = vld [vmem:[%s1 + $0x40] sm:$0xff]
      %v153 = vld [vmem:[%s1 + $0x48] sm:$0xff]
      %v154 = vld [vmem:[%s1 + $0x50] sm:$0xff]
      %v155 = vld [vmem:[%s1 + $0x58] sm:$0xff]
      %v156 = vld [vmem:[%s1 + $0x60] sm:$0xff]
      %v157 = vld [vmem:[%s1 + $0x68] sm:$0xff]
      %v158 = vld [vmem:[%s1 + $0x70] sm:$0xff]
      %v159 = vld [vmem:[%s1 + $0x78] sm:$0xff]
      %v160 = vld [vmem:[%s1 + $0x80] sm:$0xff]
      %v161 = vld [vmem:[%s1 + $0x88] sm:$0xff]
      %v162 = vld [vmem:[%s1 + $0x90] sm:$0xff]
      %v163 = vld [vmem:[%s1 + $0x98] sm:$0xff]
      %v164 = vld [vmem:[%s1 + $0xa0] sm:$0xff]
      %v165 = vld [vmem:[%s1 + $0xa8] sm:$0xff]
      %v166 = vld [vmem:[%s1 + $0xb0] sm:$0xff]
      %v167 = vld [vmem:[%s1 + $0xb8] sm:$0xff]
      %v168 = vld [vmem:[%s1 + $0xc0] sm:$0xff]
      %v169 = vld [vmem:[%s1 + $0xc8] sm:$0xff]
      %v170 = vld [vmem:[%s1 + $0xd0] sm:$0xff]
      %v171 = vld [vmem:[%s1 + $0xd8] sm:$0xff]
      %v172 = vld [vmem:[%s1 + $0xe0] sm:$0xff]
      %v173 = vld [vmem:[%s1 + $0xe8] sm:$0xff]
      %v174 = vld [vmem:[%s1 + $0xf0] sm:$0xff]
      %v175 = vld [vmem:[%s1 + $0xf8] sm:$0xff]
      %176 = vmatprep.subr.mxu0 0.0
      %177 = vmatpush1.msra.mxu0 %v144
      %178 = vmatprep.subr.mxu0 0.0
      %179 = vmatpush1.msra.mxu0 %v145
      %180 = vmatprep.subr.mxu0 0.0
      %181 = vmatpush1.msra.mxu0 %v146
      %182 = vmatprep.subr.mxu0 0.0
      %183 = vmatpush1.msra.mxu0 %v147
      %184 = vmatprep.subr.mxu0 0.0
      %185 = vmatpush1.msra.mxu0 %v148
      %186 = vmatprep.subr.mxu0 0.0
      %187 = vmatpush1.msra.mxu0 %v149
      %188 = vmatprep.subr.mxu0 0.0
      %189 = vmatpush1.msra.mxu0 %v150
      %190 = vmatprep.subr.mxu0 0.0
      %191 = vmatpush1.msra.mxu0 %v151
      %192 = vmatprep.subr.mxu0 0.0
      %193 = vmatpush1.msra.mxu0 %v152
      %194 = vmatprep.subr.mxu0 0.0
      %195 = vmatpush1.msra.mxu0 %v153
      %196 = vmatprep.subr.mxu0 0.0
      %197 = vmatpush1.msra.mxu0 %v154
      %198 = vmatprep.subr.mxu0 0.0
      %199 = vmatpush1.msra.mxu0 %v155
      %200 = vmatprep.subr.mxu0 0.0
      %201 = vmatpush1.msra.mxu0 %v156
      %202 = vmatprep.subr.mxu0 0.0
      %203 = vmatpush1.msra.mxu0 %v157
      %204 = vmatprep.subr.mxu0 0.0
      %205 = vmatpush1.msra.mxu0 %v158
      %206 = vmatprep.subr.mxu0 0.0
      %207 = vmatpush1.msra.mxu0 %v159
      %208 = vmatprep.subr.mxu0 0.0
      %209 = vmatpush1.msra.mxu0 %v160
      %210 = vmatprep.subr.mxu0 0.0
      %211 = vmatpush1.msra.mxu0 %v161
      %212 = vmatprep.subr.mxu0 0.0
      %213 = vmatpush1.msra.mxu0 %v162
      %214 = vmatprep.subr.mxu0 0.0
      %215 = vmatpush1.msra.mxu0 %v163
      %216 = vmatprep.subr.mxu0 0.0
      %217 = vmatpush1.msra.mxu0 %v164
      %218 = vmatprep.subr.mxu0 0.0
      %219 = vmatpush1.msra.mxu0 %v165
      %220 = vmatprep.subr.mxu0 0.0
      %221 = vmatpush1.msra.mxu0 %v166
      %222 = vmatprep.subr.mxu0 0.0
      %223 = vmatpush1.msra.mxu0 %v167
      %224 = vmatprep.subr.mxu0 0.0
      %225 = vmatpush1.msra.mxu0 %v168
      %226 = vmatprep.subr.mxu0 0.0
      %227 = vmatpush1.msra.mxu0 %v169
      %228 = vmatprep.subr.mxu0 0.0
      %229 = vmatpush1.msra.mxu0 %v170
      %230 = vmatprep.subr.mxu0 0.0
      %231 = vmatpush1.msra.mxu0 %v171
      %232 = vmatprep.subr.mxu0 0.0
      %233 = vmatpush1.msra.mxu0 %v172
      %234 = vmatprep.subr.mxu0 0.0
      %235 = vmatpush1.msra.mxu0 %v173
      %236 = vmatprep.subr.mxu0 0.0
      %237 = vmatpush1.msra.mxu0 %v174
      %238 = vmatprep.subr.mxu0 0.0
      %239 = vmatpush1.msra.mxu0 %v175
      %240 = vmatprep.mubr.f32.mxu0 %v143
      %241 = vmatmul.mubr.f32.gmra.mrb[0].mxu0 %v142
      %v242 = vpop.f32.mrb[0].mxu0
      %v243 = vadd.f32 0.0, %v242
      %v244 = vpop.f32.mrb[0].mxu0
      %245 = vdwg.mxu0
      %vm246 = vcmask 523264
      %247 = vst.msk [vmem:[%s141] sm:$0xff] %vm246, %v243
      %p248 = scmp.lt.s32.totalorder %s13, 1
      %s249 = scalar_select %p248, %s13, 1
      %s250 = smul.addr %s249, 8
      %s251 = scalar_lea.vmem %s2, %s250
      // Predicated region
      $region29: #{interpolate.1} parent=27 // pred_check
        %p252 = pneg %p78
      $region30: #{interpolate.1} parent=27 // pred_check_branch
        %254 = sbr.rel (%p252) target = $region32
      $region31: #{interpolate.1} parent=27 // pred_region
        _
      $region32: #{interpolate.1} parent=27 // pred_fallthru
        _
    $region28: #{interpolate.1} parent=5 // pred_fallthru
      _
    %p255 = scmp.le.s32.totalorder 2, %s8
    // Predicated region
    $region33: #{interpolate.1} parent=5 // pred_check
      %p256 = pneg %p255
    $region34: #{interpolate.1} parent=5 // pred_check_branch
      %258 = sbr.rel (%p256) target = $region36
    $region35: #{interpolate.1} parent=5 // pred_region
      %s259 = ssub.s32 %s8, 2
      // Predicated region
      $region37: #{interpolate.1} parent=35 // pred_check
        %p260 = pneg %p84
      $region38: #{interpolate.1} parent=35 // pred_check_branch
        %262 = sbr.rel (%p260) target = $region40
      $region39: #{interpolate.1} parent=35 // pred_region
        %p263 = scmp.lt.s32.totalorder %s14, 1
        %s264 = scalar_select %p263, %s14, 1
        %s265 = smul.addr %s264, 8
        %s266 = scalar_lea.vmem %s2, %s265
      $region40: #{interpolate.1} parent=35 // pred_fallthru
        _
    $region36: #{interpolate.1} parent=5 // pred_fallthru
      _
  $region6: #{interpolate.1} parent=0 // loop_footer
    %s12 = sadd.s32 1, %s8
  $region7: #{interpolate.1} parent=0 // loop_footer_branch
    %7 = sbr.rel target = $region3
  $region8: #{interpolate.1} parent=0 // loop_exit
    _

</llo_original>
